<compile_context>
chip_gen: v6e
topology: v6e:2x2x1
jax: 0.10.0
libtpu: 0.0.40
codegen_flags: <defaults>
</compile_context>

<pallas_src>
import functools

import numpy as np
import jax
import jax.numpy as jnp
from jax import lax
from jax.experimental import pallas as pl
from jax.experimental.pallas import tpu as pltpu


# ----------------------------------------------------------------------------
# Fused kernel: weighted CE + top-1 stats + cardinality + matched-box L1/GIoU
# ----------------------------------------------------------------------------
def _criterion_kernel(logits_ref, tgt_ref, box_ref, out_ref, acc_ref,
                      *, num_classes, eos_coef):
    """Grid = (B//TB, Q//TQ).  Block shapes:
         logits_ref : (TB, TQ, K)    native layout (queries on sublanes)
         tgt_ref    : (TB, TQ, 1)    int32 padded target-class map
         box_ref    : (TB, 16, NBP)  rows 0-3 src cxcywh, 4-7 tgt cxcywh, 8 mask
         out_ref    : (TB, 1, 128)   per-image packed stats (lane dense)
         acc_ref    : (TB, TQ, 128)  lane-dense per-step accumulator (VMEM)
       out lanes: 0 ce_num, 1 correct, 2 card_pred, 3 l1_sum, 4 giou_sum.
    """
    q_step = pl.program_id(1)
    nq = pl.num_programs(1)
    nc_f = jnp.float32(num_classes)

    # ---- per-(batch-block) accumulator init -------------------------------
    @pl.when(q_step == 0)
    def _():
        acc_ref[...] = jnp.zeros_like(acc_ref)

    x = logits_ref[...].astype(jnp.float32)                       # (TB, TQ, K)
    tgt = tgt_ref[...].astype(jnp.float32)                        # (TB, TQ, 1)

    iota_k = lax.broadcasted_iota(jnp.int32, x.shape, 2).astype(jnp.float32)

    # ---- weighted softmax cross-entropy (per-query contributions) ---------
    m = jnp.max(x, axis=2, keepdims=True)                         # (TB, TQ, 1)
    sumexp = jnp.sum(jnp.exp(x - m), axis=2, keepdims=True)
    lse = m + jnp.log(sumexp)
    logit_t = jnp.sum(jnp.where(iota_k == tgt, x, 0.0), axis=2, keepdims=True)
    w_t = jnp.where(tgt == nc_f, jnp.float32(eos_coef), jnp.float32(1.0))
    ce_q = (lse - logit_t) * w_t                                  # (TB, TQ, 1)

    # ---- argmax over classes (first occurrence; reuses m), stats ----------
    kf = jnp.float32(x.shape[2])
    amax = jnp.min(jnp.where(x == m, iota_k, kf), axis=2, keepdims=True)
    is_obj = (amax != nc_f).astype(jnp.float32)                   # cardinality
    matched = (tgt != nc_f).astype(jnp.float32)
    corr_q = matched * (amax == tgt).astype(jnp.float32)

    # ---- lane-dense accumulation (pure VPU adds; reduced only at finalize) -
    lane_a = lax.broadcasted_iota(jnp.int32, acc_ref.shape, 2)
    acc_ref[...] += (jnp.where(lane_a == 0, ce_q, 0.0)
                     + jnp.where(lane_a == 1, corr_q, 0.0)
                     + jnp.where(lane_a == 2, is_obj, 0.0))

    # ---- finalize: reduce accumulator, add box losses, pack output --------
    # NOTE: out_ref is only written here; this is valid because its index_map
    # is invariant over the q axis and q is the innermost "arbitrary" axis.
    @pl.when(q_step == nq - 1)
    def _():
        eps = jnp.float32(1e-7)
        stats = jnp.sum(acc_ref[...], axis=1, keepdims=True)      # (TB, 1, 128)

        pk = box_ref[...].astype(jnp.float32)                     # (TB, 16, NBP)
        sb = pk[:, 0:4, :]
        tb = pk[:, 4:8, :]
        msk = pk[:, 8:9, :]

        def _sum12(v):  # sum over box axis (lanes) then coord axis (sublanes)
            return jnp.sum(jnp.sum(v, axis=2, keepdims=True), axis=1, keepdims=True)

        l1_sum = _sum12(jnp.abs(sb - tb) * msk)                   # (TB, 1, 1)

        def corners(b):
            cx = b[:, 0:1, :]
            cy = b[:, 1:2, :]
            w = b[:, 2:3, :]
            h = b[:, 3:4, :]
            return cx - 0.5 * w, cy - 0.5 * h, cx + 0.5 * w, cy + 0.5 * h

        sx1, sy1, sx2, sy2 = corners(sb)
        tx1, ty1, tx2, ty2 = corners(tb)
        area_s = (sx2 - sx1) * (sy2 - sy1)
        area_t = (tx2 - tx1) * (ty2 - ty1)
        inter = (jnp.maximum(jnp.minimum(sx2, tx2) - jnp.maximum(sx1, tx1), 0.0) *
                 jnp.maximum(jnp.minimum(sy2, ty2) - jnp.maximum(sy1, ty1), 0.0))
        union = area_s + area_t - inter
        iou = inter / jnp.maximum(union, eps)
        enc = (jnp.maximum(jnp.maximum(sx2, tx2) - jnp.minimum(sx1, tx1), 0.0) *
               jnp.maximum(jnp.maximum(sy2, ty2) - jnp.minimum(sy1, ty1), 0.0))
        giou = iou - (enc - union) / jnp.maximum(enc, eps)
        giou_sum = _sum12((1.0 - giou) * msk)                     # (TB, 1, 1)

        lane_o = lax.broadcasted_iota(jnp.int32, out_ref.shape, 2)
        out_ref[...] = (stats
                        + jnp.where(lane_o == 3, l1_sum, 0.0)
                        + jnp.where(lane_o == 4, giou_sum, 0.0))


def _pick_tiles(B, Q, K):
    """Batch-block TB (largest of 8/4/2/1 dividing B) and query tile TQ."""
    TB = 8 if B % 8 == 0 else 4 if B % 4 == 0 else 2 if B % 2 == 0 else 1
    # Cap a single live (TB, TQ, K) f32 temporary to keep vreg/VMEM pressure
    # reasonable while keeping the grid as small as possible.
    budget = 512 * 1024
    tq = Q
    for t in (256, 128, 64, 32, 16, 8):
        if Q % t == 0 and TB * t * K * 4 <= budget:
            tq = t
            break
    return TB, tq


def _build_criterion_call(B, Q, K, NBP, logits_dtype, *, num_classes, eos_coef):
    TB, TQ = _pick_tiles(B, Q, K)
    nb, nq = B // TB, Q // TQ
    kernel = functools.partial(_criterion_kernel,
                               num_classes=num_classes, eos_coef=eos_coef)
    itemsize = jnp.dtype(logits_dtype).itemsize
    cost = pl.CostEstimate(
        flops=int(12 * B * Q * K + 64 * B * NBP),
        transcendentals=int(B * Q * K + B * Q),
        bytes_accessed=int(B * Q * K * itemsize + B * Q * 4
                           + B * 16 * NBP * 4 + B * 128 * 4),
    )
    grid_spec = pltpu.PrefetchScalarGridSpec(
        num_scalar_prefetch=0,
        grid=(nb, nq),
        in_specs=[
            pl.BlockSpec((TB, TQ, K), lambda b, q: (b, q, 0)),    # logits (B,Q,K)
            pl.BlockSpec((TB, TQ, 1), lambda b, q: (b, q, 0)),    # target classes
            pl.BlockSpec((TB, 16, NBP), lambda b, q: (b, 0, 0)),  # packed boxes
        ],
        out_specs=pl.BlockSpec((TB, 1, 128), lambda b, q: (b, 0, 0)),
        scratch_shapes=[pltpu.VMEM((TB, TQ, 128), jnp.float32)],
    )
    return pl.pallas_call(
        kernel,
        out_shape=jax.ShapeDtypeStruct((B, 1, 128), jnp.float32),
        grid_spec=grid_spec,
        compiler_params=pltpu.CompilerParams(
            dimension_semantics=("parallel", "arbitrary")),
        cost_estimate=cost,
    )


# ----------------------------------------------------------------------------
# Fixed-shape (jittable) loss on padded targets
# ----------------------------------------------------------------------------
def set_criterion_loss(pred_logits, pred_boxes, labels_pad, boxes_pad, lengths,
                       *, num_classes, eos_coef):
    """pred_logits (B,Q,K) any float dtype, pred_boxes (B,Q,4),
    labels_pad (B,NB) int32, boxes_pad (B,NB,4), lengths (B,) int32."""
    B, Q, K = pred_logits.shape
    assert K == num_classes + 1
    NB = labels_pad.shape[1]
    assert NB <= Q, "identity matching requires #targets <= #queries"

    # TODO(synk): Hungarian matcher has no clean Pallas equivalent; identity
    #             matching (query i <-> target i) is used deterministically.
    q_idx = jnp.arange(Q, dtype=jnp.int32)
    labels_q = jnp.full((B, Q), num_classes, jnp.int32)
    labels_q = labels_q.at[:, :NB].set(labels_pad.astype(jnp.int32))
    target_classes = jnp.where(q_idx[None, :] < lengths[:, None],
                               labels_q, num_classes)             # (B, Q)
    tgt3 = target_classes.astype(jnp.int32)[..., None]            # (B, Q, 1)

    # packed box tensor: [src cxcywh | tgt cxcywh | mask | zeros] on sublanes,
    # box index padded to a multiple of 128 on the lane axis.
    NBP = max(128, ((NB + 127) // 128) * 128)
    src_b = jnp.transpose(pred_boxes[:, :NB, :], (0, 2, 1)).astype(jnp.float32)
    tgt_b = jnp.transpose(boxes_pad, (0, 2, 1)).astype(jnp.float32)
    bmask = (jnp.arange(NB)[None, :] < lengths[:, None]).astype(jnp.float32)
    bmask = bmask[:, None, :]
    packed = jnp.concatenate(
        [src_b, tgt_b, bmask, jnp.zeros((B, 7, NB), jnp.float32)], axis=1)
    packed = jnp.pad(packed, ((0, 0), (0, 0), (0, NBP - NB)))     # (B, 16, NBP)

    call = _build_criterion_call(B, Q, K, NBP, pred_logits.dtype,
                                 num_classes=num_classes, eos_coef=eos_coef)
    out = call(pred_logits, tgt3, packed)[:, 0, :]                # (B, 128)

    lengths_f = lengths.astype(jnp.float32)
    matched = (target_classes != num_classes).astype(jnp.float32)
    nmatch = jnp.sum(matched)                                     # CE / accuracy denom
    ce_den = nmatch + (B * Q - nmatch) * eos_coef
    num_boxes = jnp.maximum(jnp.sum(lengths_f), 1.0)

    return {
        "loss_ce": jnp.sum(out[:, 0]) / ce_den,
        "class_error": 100.0 - 100.0 * jnp.sum(out[:, 1]) / jnp.maximum(nmatch, 1.0),
        "cardinality_error": jnp.mean(jnp.abs(out[:, 2] - lengths_f)),
        "loss_bbox": jnp.sum(out[:, 3]) / num_boxes,
        "loss_giou": jnp.sum(out[:, 4]) / num_boxes,
    }


def pad_targets(targets, num_classes):
    """Ragged list-of-dicts -> fixed-shape padded arrays (host side, not jitted)."""
    B = len(targets)
    max_b = max(1, max(int(t["labels"].shape[0]) for t in targets))
    labels = np.full((B, max_b), num_classes, np.int32)
    boxes = np.zeros((B, max_b, 4), np.float32)
    lengths = np.zeros((B,), np.int32)
    for b, t in enumerate(targets):
        n = int(t["labels"].shape[0])
        lengths[b] = n
        if n:
            labels[b, :n] = np.asarray(t["labels"], np.int32)
            boxes[b, :n] = np.asarray(t["boxes"], np.float32)
    return jnp.asarray(labels), jnp.asarray(boxes), jnp.asarray(lengths)


def set_criterion_forward(pred_logits, pred_boxes, targets, num_classes, eos_coef):
    """Module-API parity wrapper (losses = ['labels','cardinality','boxes'],
    no aux_outputs / masks)."""
    labels_pad, boxes_pad, lengths = pad_targets(targets, num_classes)
    return set_criterion_loss(pred_logits, pred_boxes, labels_pad, boxes_pad, lengths,
                              num_classes=num_classes, eos_coef=eos_coef)


# ----------------------------------------------------------------------------
# Pure-JAX reference (identity matching) for self-check
# ----------------------------------------------------------------------------
def _reference_losses(pred_logits, pred_boxes, labels_pad, boxes_pad, lengths,
                      *, num_classes, eos_coef):
    B, Q, K = pred_logits.shape
    NB = labels_pad.shape[1]
    x = pred_logits.astype(jnp.float32)
    q_idx = jnp.arange(Q)
    labels_q = jnp.full((B, Q), num_classes, jnp.int32)
    labels_q = labels_q.at[:, :NB].set(labels_pad.astype(jnp.int32))
    tgt = jnp.where(q_idx[None, :] < lengths[:, None], labels_q, num_classes)

    logp = jax.nn.log_softmax(x, axis=-1)
    logp_t = jnp.take_along_axis(logp, tgt[..., None], axis=-1)[..., 0]
    w = jnp.where(tgt == num_classes, eos_coef, 1.0)
    loss_ce = jnp.sum(-logp_t * w) / jnp.sum(w)

    amax = jnp.argmax(x, axis=-1)
    card_pred = jnp.sum((amax != num_classes).astype(jnp.float32), axis=1)
    card_err = jnp.mean(jnp.abs(card_pred - lengths.astype(jnp.float32)))
    matched = tgt != num_classes
    correct = jnp.sum(jnp.where(matched, (amax == tgt).astype(jnp.float32), 0.0))
    nmatch = jnp.sum(matched.astype(jnp.float32))
    class_error = 100.0 - 100.0 * correct / jnp.maximum(nmatch, 1.0)

    msk = (jnp.arange(NB)[None, :] < lengths[:, None]).astype(jnp.float32)
    s = pred_boxes[:, :NB, :].astype(jnp.float32)
    t = boxes_pad.astype(jnp.float32)
    num_boxes = jnp.maximum(jnp.sum(lengths).astype(jnp.float32), 1.0)
    loss_bbox = jnp.sum(jnp.abs(s - t) * msk[..., None]) / num_boxes

    def to_xyxy(b):
        cx, cy, w_, h_ = b[..., 0], b[..., 1], b[..., 2], b[..., 3]
        return cx - 0.5 * w_, cy - 0.5 * h_, cx + 0.5 * w_, cy + 0.5 * h_

    sx1, sy1, sx2, sy2 = to_xyxy(s)
    tx1, ty1, tx2, ty2 = to_xyxy(t)
    area_s = (sx2 - sx1) * (sy2 - sy1)
    area_t = (tx2 - tx1) * (ty2 - ty1)
    inter = (jnp.maximum(jnp.minimum(sx2, tx2) - jnp.maximum(sx1, tx1), 0.0) *
             jnp.maximum(jnp.minimum(sy2, ty2) - jnp.maximum(sy1, ty1), 0.0))
    union = area_s + area_t - inter
    iou = inter / jnp.maximum(union, 1e-7)
    enc = (jnp.maximum(jnp.maximum(sx2, tx2) - jnp.minimum(sx1, tx1), 0.0) *
           jnp.maximum(jnp.maximum(sy2, ty2) - jnp.minimum(sy1, ty1), 0.0))
    giou = iou - (enc - union) / jnp.maximum(enc, 1e-7)
    loss_giou = jnp.sum((1.0 - giou) * msk) / num_boxes

    return {"loss_ce": loss_ce, "class_error": class_error,
            "cardinality_error": card_err, "loss_bbox": loss_bbox,
            "loss_giou": loss_giou}


# ----------------------------------------------------------------------------
# Demo
# ----------------------------------------------------------------------------
if __name__ == "__main__":
    key = jax.random.PRNGKey(0)
    B, Q, num_classes = 2, 8, 4
    K = num_classes + 1
    eos_coef = 0.1

    k1, k2, k3, k4, k5, k6 = jax.random.split(key, 6)
    # bf16 logits cross the pallas_call boundary unchanged (cast happens in-kernel)
    pred_logits = jax.random.normal(k1, (B, Q, K), jnp.float32).astype(jnp.bfloat16)
    pred_boxes = jax.random.uniform(k2, (B, Q, 4), jnp.float32, minval=0.2, maxval=0.5)

    n_per_image = [3, 2]
    targets = [
        {"labels": jax.random.randint(k3, (n_per_image[0],), 0, num_classes),
         "boxes": jax.random.uniform(k4, (n_per_image[0], 4), jnp.float32, 0.25, 0.45)},
        {"labels": jax.random.randint(k5, (n_per_image[1],), 0, num_classes),
         "boxes": jax.random.uniform(k6, (n_per_image[1], 4), jnp.float32, 0.25, 0.45)},
    ]

    labels_pad, boxes_pad, lengths = pad_targets(targets, num_classes)
    loss_fn = jax.jit(functools.partial(set_criterion_loss,
                                        num_classes=num_classes, eos_coef=eos_coef))
    losses = loss_fn(pred_logits, pred_boxes, labels_pad, boxes_pad, lengths)
    losses = {k_: jax.block_until_ready(v) for k_, v in losses.items()}

    ref = _reference_losses(pred_logits, pred_boxes, labels_pad, boxes_pad, lengths,
                            num_classes=num_classes, eos_coef=eos_coef)
    for name in ("loss_ce", "class_error", "cardinality_error", "loss_bbox", "loss_giou"):
        np.testing.assert_allclose(np.asarray(losses[name]), np.asarray(ref[name]),
                                   rtol=1e-4, atol=1e-4)

    print("KERNEL_OK")
</pallas_src>

<mosaic_0001>
module attributes {stable_mosaic.version = 11 : i64} {
  func.func @_criterion_kernel(%arg0: i32, %arg1: i32, %arg2: memref<2x8x5xbf16, #tpu.memory_space<vmem>>, %arg3: memref<2x8x1xi32, #tpu.memory_space<vmem>>, %arg4: memref<2x16x128xf32, #tpu.memory_space<vmem>>, %arg5: memref<2x1x128xf32, #tpu.memory_space<vmem>>, %arg6: memref<2x8x128xf32, #tpu.memory_space<vmem>>) attributes {dimension_semantics = [#tpu.dimension_semantics<parallel>, #tpu.dimension_semantics<arbitrary>], iteration_bounds = array<i64: 1, 1>, scalar_prefetch = 0 : i64, scratch_operands = 1 : i64, tpu.core_type = #tpu.core_type<tc>, window_params = [{transform_indices = @transform_0, window_bounds = array<i64: 2, 8, 5>}, {transform_indices = @transform_1, window_bounds = array<i64: 2, 8, 1>}, {transform_indices = @transform_2, window_bounds = array<i64: 2, 16, 128>}, {transform_indices = @transform_3, window_bounds = array<i64: 2, 1, 128>}]} {
    %c0_i32 = arith.constant 0 : i32
    %0 = arith.cmpi eq, %arg1, %c0_i32 : i32
    %1 = arith.extui %0 : i1 to i32
    %c0_i32_0 = arith.constant 0 : i32
    %2 = arith.cmpi ne, %1, %c0_i32_0 : i32
    scf.if %2 {
      %cst_28 = arith.constant 0.000000e+00 : f32
      %76 = vector.broadcast %cst_28 : f32 to vector<2x8x128xf32>
      %c0_29 = arith.constant 0 : index
      %c0_30 = arith.constant 0 : index
      %c0_31 = arith.constant 0 : index
      %77 = vector.load %arg6[%c0_29, %c0_30, %c0_31] : memref<2x8x128xf32, #tpu.memory_space<vmem>>, vector<2x8x128xf32>
      tpu.vector_store %arg6[%c0_29, %c0_30, %c0_31], %76 {strides = array<i32>} : memref<2x8x128xf32, #tpu.memory_space<vmem>>, vector<2x8x128xf32>,
    } else {
    }
    %c0 = arith.constant 0 : index
    %c0_1 = arith.constant 0 : index
    %c0_2 = arith.constant 0 : index
    %3 = vector.load %arg2[%c0, %c0_1, %c0_2] : memref<2x8x5xbf16, #tpu.memory_space<vmem>>, vector<2x8x5xbf16>
    %4 = arith.extf %3 : vector<2x8x5xbf16> to vector<2x8x5xf32>
    %c0_3 = arith.constant 0 : index
    %c0_4 = arith.constant 0 : index
    %c0_5 = arith.constant 0 : index
    %5 = vector.load %arg3[%c0_3, %c0_4, %c0_5] : memref<2x8x1xi32, #tpu.memory_space<vmem>>, vector<2x8x1xi32>
    %6 = arith.sitofp %5 : vector<2x8x1xi32> to vector<2x8x1xf32>
    %7 = tpu.iota {dimensions = array<i32: 2>} : vector<2x8x5xi32>
    %8 = arith.sitofp %7 : vector<2x8x5xi32> to vector<2x8x5xf32>
    %cst = arith.constant dense<0xFF800000> : vector<2x8xf32>
    %9 = vector.multi_reduction <maximumf>, %4, %cst [2] : vector<2x8x5xf32> to vector<2x8xf32>
    %10 = vector.shape_cast %9 : vector<2x8xf32> to vector<2x8x1xf32>
    %11 = vector.broadcast %10 : vector<2x8x1xf32> to vector<2x8x5xf32>
    %12 = arith.subf %4, %11 : vector<2x8x5xf32>
    %13 = math.exp %12 : vector<2x8x5xf32>
    %cst_6 = arith.constant dense<0.000000e+00> : vector<2x8xf32>
    %14 = vector.multi_reduction <add>, %13, %cst_6 [2] : vector<2x8x5xf32> to vector<2x8xf32>
    %15 = vector.shape_cast %14 : vector<2x8xf32> to vector<2x8x1xf32>
    %16 = math.log %15 : vector<2x8x1xf32>
    %17 = arith.addf %10, %16 : vector<2x8x1xf32>
    %18 = vector.broadcast %6 : vector<2x8x1xf32> to vector<2x8x5xf32>
    %19 = arith.cmpf oeq, %8, %18 : vector<2x8x5xf32>
    %cst_7 = arith.constant 0.000000e+00 : f32
    %20 = vector.broadcast %cst_7 : f32 to vector<2x8x5xf32>
    %21 = arith.select %19, %4, %20 : vector<2x8x5xi1>, vector<2x8x5xf32>
    %cst_8 = arith.constant dense<0.000000e+00> : vector<2x8xf32>
    %22 = vector.multi_reduction <add>, %21, %cst_8 [2] : vector<2x8x5xf32> to vector<2x8xf32>
    %23 = vector.shape_cast %22 : vector<2x8xf32> to vector<2x8x1xf32>
    %cst_9 = arith.constant 4.000000e+00 : f32
    %24 = vector.broadcast %cst_9 : f32 to vector<2x8x1xf32>
    %25 = arith.cmpf oeq, %6, %24 : vector<2x8x1xf32>
    %cst_10 = arith.constant 1.000000e-01 : f32
    %cst_11 = arith.constant 1.000000e+00 : f32
    %26 = vector.broadcast %cst_10 : f32 to vector<2x8x1xf32>
    %27 = vector.broadcast %cst_11 : f32 to vector<2x8x1xf32>
    %28 = arith.select %25, %26, %27 : vector<2x8x1xi1>, vector<2x8x1xf32>
    %29 = arith.subf %17, %23 : vector<2x8x1xf32>
    %30 = arith.mulf %29, %28 : vector<2x8x1xf32>
    %31 = vector.broadcast %10 : vector<2x8x1xf32> to vector<2x8x5xf32>
    %32 = arith.cmpf oeq, %4, %31 : vector<2x8x5xf32>
    %cst_12 = arith.constant 5.000000e+00 : f32
    %33 = vector.broadcast %cst_12 : f32 to vector<2x8x5xf32>
    %34 = arith.select %32, %8, %33 : vector<2x8x5xi1>, vector<2x8x5xf32>
    %cst_13 = arith.constant dense<0x7F800000> : vector<2x8xf32>
    %35 = vector.multi_reduction <minimumf>, %34, %cst_13 [2] : vector<2x8x5xf32> to vector<2x8xf32>
    %36 = vector.shape_cast %35 : vector<2x8xf32> to vector<2x8x1xf32>
    %cst_14 = arith.constant 4.000000e+00 : f32
    %37 = vector.broadcast %cst_14 : f32 to vector<2x8x1xf32>
    %38 = arith.cmpf one, %36, %37 : vector<2x8x1xf32>
    %39 = arith.extui %38 : vector<2x8x1xi1> to vector<2x8x1xi32>
    %40 = arith.sitofp %39 : vector<2x8x1xi32> to vector<2x8x1xf32>
    %cst_15 = arith.constant 4.000000e+00 : f32
    %41 = vector.broadcast %cst_15 : f32 to vector<2x8x1xf32>
    %42 = arith.cmpf one, %6, %41 : vector<2x8x1xf32>
    %43 = arith.extui %42 : vector<2x8x1xi1> to vector<2x8x1xi32>
    %44 = arith.sitofp %43 : vector<2x8x1xi32> to vector<2x8x1xf32>
    %45 = arith.cmpf oeq, %36, %6 : vector<2x8x1xf32>
    %46 = arith.extui %45 : vector<2x8x1xi1> to vector<2x8x1xi32>
    %47 = arith.sitofp %46 : vector<2x8x1xi32> to vector<2x8x1xf32>
    %48 = arith.mulf %44, %47 : vector<2x8x1xf32>
    %49 = tpu.iota {dimensions = array<i32: 2>} : vector<2x8x128xi32>
    %c0_16 = arith.constant 0 : index
    %c0_17 = arith.constant 0 : index
    %c0_18 = arith.constant 0 : index
    %50 = vector.load %arg6[%c0_16, %c0_17, %c0_18] : memref<2x8x128xf32, #tpu.memory_space<vmem>>, vector<2x8x128xf32>
    %c0_i32_19 = arith.constant 0 : i32
    %51 = vector.broadcast %c0_i32_19 : i32 to vector<2x8x128xi32>
    %52 = arith.cmpi eq, %49, %51 : vector<2x8x128xi32>
    %cst_20 = arith.constant 0.000000e+00 : f32
    %53 = vector.shape_cast %30 : vector<2x8x1xf32> to vector<2x8x1xf32>
    %54 = vector.broadcast %53 : vector<2x8x1xf32> to vector<2x8x128xf32>
    %55 = vector.broadcast %cst_20 : f32 to vector<2x8x128xf32>
    %56 = arith.select %52, %54, %55 : vector<2x8x128xi1>, vector<2x8x128xf32>
    %c1_i32 = arith.constant 1 : i32
    %57 = vector.broadcast %c1_i32 : i32 to vector<2x8x128xi32>
    %58 = arith.cmpi eq, %49, %57 : vector<2x8x128xi32>
    %cst_21 = arith.constant 0.000000e+00 : f32
    %59 = vector.shape_cast %48 : vector<2x8x1xf32> to vector<2x8x1xf32>
    %60 = vector.broadcast %59 : vector<2x8x1xf32> to vector<2x8x128xf32>
    %61 = vector.broadcast %cst_21 : f32 to vector<2x8x128xf32>
    %62 = arith.select %58, %60, %61 : vector<2x8x128xi1>, vector<2x8x128xf32>
    %63 = arith.addf %56, %62 : vector<2x8x128xf32>
    %c2_i32 = arith.constant 2 : i32
    %64 = vector.broadcast %c2_i32 : i32 to vector<2x8x128xi32>
    %65 = arith.cmpi eq, %49, %64 : vector<2x8x128xi32>
    %cst_22 = arith.constant 0.000000e+00 : f32
    %66 = vector.shape_cast %40 : vector<2x8x1xf32> to vector<2x8x1xf32>
    %67 = vector.broadcast %66 : vector<2x8x1xf32> to vector<2x8x128xf32>
    %68 = vector.broadcast %cst_22 : f32 to vector<2x8x128xf32>
    %69 = arith.select %65, %67, %68 : vector<2x8x128xi1>, vector<2x8x128xf32>
    %70 = arith.addf %63, %69 : vector<2x8x128xf32>
    %71 = arith.addf %50, %70 : vector<2x8x128xf32>
    %c0_23 = arith.constant 0 : index
    %c0_24 = arith.constant 0 : index
    %c0_25 = arith.constant 0 : index
    %72 = vector.load %arg6[%c0_23, %c0_24, %c0_25] : memref<2x8x128xf32, #tpu.memory_space<vmem>>, vector<2x8x128xf32>
    tpu.vector_store %arg6[%c0_23, %c0_24, %c0_25], %71 {strides = array<i32>} : memref<2x8x128xf32, #tpu.memory_space<vmem>>, vector<2x8x128xf32>,
    %c0_i32_26 = arith.constant 0 : i32
    %73 = arith.cmpi eq, %arg1, %c0_i32_26 : i32
    %74 = arith.extui %73 : i1 to i32
    %c0_i32_27 = arith.constant 0 : i32
    %75 = arith.cmpi ne, %74, %c0_i32_27 : i32
    scf.if %75 {
      %c0_28 = arith.constant 0 : index
      %c0_29 = arith.constant 0 : index
      %c0_30 = arith.constant 0 : index
      %76 = vector.load %arg6[%c0_28, %c0_29, %c0_30] : memref<2x8x128xf32, #tpu.memory_space<vmem>>, vector<2x8x128xf32>
      %cst_31 = arith.constant dense<0.000000e+00> : vector<2x128xf32>
      %77 = vector.multi_reduction <add>, %76, %cst_31 [1] : vector<2x8x128xf32> to vector<2x128xf32>
      %78 = vector.shape_cast %77 : vector<2x128xf32> to vector<2x1x128xf32>
      %c0_32 = arith.constant 0 : index
      %c0_33 = arith.constant 0 : index
      %c0_34 = arith.constant 0 : index
      %79 = vector.load %arg4[%c0_32, %c0_33, %c0_34] : memref<2x16x128xf32, #tpu.memory_space<vmem>>, vector<2x16x128xf32>
      %80 = vector.extract_strided_slice %79 {offsets = [0, 0, 0], sizes = [2, 4, 128], strides = [1, 1, 1]} : vector<2x16x128xf32> to vector<2x4x128xf32>
      %81 = vector.extract_strided_slice %79 {offsets = [0, 4, 0], sizes = [2, 4, 128], strides = [1, 1, 1]} : vector<2x16x128xf32> to vector<2x4x128xf32>
      %82 = vector.extract_strided_slice %79 {offsets = [0, 8, 0], sizes = [2, 1, 128], strides = [1, 1, 1]} : vector<2x16x128xf32> to vector<2x1x128xf32>
      %83 = arith.subf %80, %81 : vector<2x4x128xf32>
      %84 = math.absf %83 : vector<2x4x128xf32>
      %85 = vector.broadcast %82 : vector<2x1x128xf32> to vector<2x4x128xf32>
      %86 = arith.mulf %84, %85 : vector<2x4x128xf32>
      %cst_35 = arith.constant dense<0.000000e+00> : vector<2x4xf32>
      %87 = vector.multi_reduction <add>, %86, %cst_35 [2] : vector<2x4x128xf32> to vector<2x4xf32>
      %88 = vector.shape_cast %87 : vector<2x4xf32> to vector<2x4x1xf32>
      %cst_36 = arith.constant dense<0.000000e+00> : vector<2x1xf32>
      %89 = vector.multi_reduction <add>, %88, %cst_36 [1] : vector<2x4x1xf32> to vector<2x1xf32>
      %90 = vector.shape_cast %89 : vector<2x1xf32> to vector<2x1x1xf32>
      %91 = vector.extract_strided_slice %80 {offsets = [0, 0, 0], sizes = [2, 1, 128], strides = [1, 1, 1]} : vector<2x4x128xf32> to vector<2x1x128xf32>
      %92 = vector.extract_strided_slice %80 {offsets = [0, 1, 0], sizes = [2, 1, 128], strides = [1, 1, 1]} : vector<2x4x128xf32> to vector<2x1x128xf32>
      %93 = vector.extract_strided_slice %80 {offsets = [0, 2, 0], sizes = [2, 1, 128], strides = [1, 1, 1]} : vector<2x4x128xf32> to vector<2x1x128xf32>
      %94 = vector.extract_strided_slice %80 {offsets = [0, 3, 0], sizes = [2, 1, 128], strides = [1, 1, 1]} : vector<2x4x128xf32> to vector<2x1x128xf32>
      %cst_37 = arith.constant 5.000000e-01 : f32
      %95 = vector.broadcast %cst_37 : f32 to vector<2x1x128xf32>
      %96 = arith.mulf %95, %93 : vector<2x1x128xf32>
      %97 = arith.subf %91, %96 : vector<2x1x128xf32>
      %cst_38 = arith.constant 5.000000e-01 : f32
      %98 = vector.broadcast %cst_38 : f32 to vector<2x1x128xf32>
      %99 = arith.mulf %98, %94 : vector<2x1x128xf32>
      %100 = arith.subf %92, %99 : vector<2x1x128xf32>
      %cst_39 = arith.constant 5.000000e-01 : f32
      %101 = vector.broadcast %cst_39 : f32 to vector<2x1x128xf32>
      %102 = arith.mulf %101, %93 : vector<2x1x128xf32>
      %103 = arith.addf %91, %102 : vector<2x1x128xf32>
      %cst_40 = arith.constant 5.000000e-01 : f32
      %104 = vector.broadcast %cst_40 : f32 to vector<2x1x128xf32>
      %105 = arith.mulf %104, %94 : vector<2x1x128xf32>
      %106 = arith.addf %92, %105 : vector<2x1x128xf32>
      %107 = vector.extract_strided_slice %81 {offsets = [0, 0, 0], sizes = [2, 1, 128], strides = [1, 1, 1]} : vector<2x4x128xf32> to vector<2x1x128xf32>
      %108 = vector.extract_strided_slice %81 {offsets = [0, 1, 0], sizes = [2, 1, 128], strides = [1, 1, 1]} : vector<2x4x128xf32> to vector<2x1x128xf32>
      %109 = vector.extract_strided_slice %81 {offsets = [0, 2, 0], sizes = [2, 1, 128], strides = [1, 1, 1]} : vector<2x4x128xf32> to vector<2x1x128xf32>
      %110 = vector.extract_strided_slice %81 {offsets = [0, 3, 0], sizes = [2, 1, 128], strides = [1, 1, 1]} : vector<2x4x128xf32> to vector<2x1x128xf32>
      %cst_41 = arith.constant 5.000000e-01 : f32
      %111 = vector.broadcast %cst_41 : f32 to vector<2x1x128xf32>
      %112 = arith.mulf %111, %109 : vector<2x1x128xf32>
      %113 = arith.subf %107, %112 : vector<2x1x128xf32>
      %cst_42 = arith.constant 5.000000e-01 : f32
      %114 = vector.broadcast %cst_42 : f32 to vector<2x1x128xf32>
      %115 = arith.mulf %114, %110 : vector<2x1x128xf32>
      %116 = arith.subf %108, %115 : vector<2x1x128xf32>
      %cst_43 = arith.constant 5.000000e-01 : f32
      %117 = vector.broadcast %cst_43 : f32 to vector<2x1x128xf32>
      %118 = arith.mulf %117, %109 : vector<2x1x128xf32>
      %119 = arith.addf %107, %118 : vector<2x1x128xf32>
      %cst_44 = arith.constant 5.000000e-01 : f32
      %120 = vector.broadcast %cst_44 : f32 to vector<2x1x128xf32>
      %121 = arith.mulf %120, %110 : vector<2x1x128xf32>
      %122 = arith.addf %108, %121 : vector<2x1x128xf32>
      %123 = arith.subf %103, %97 : vector<2x1x128xf32>
      %124 = arith.subf %106, %100 : vector<2x1x128xf32>
      %125 = arith.mulf %123, %124 : vector<2x1x128xf32>
      %126 = arith.subf %119, %113 : vector<2x1x128xf32>
      %127 = arith.subf %122, %116 : vector<2x1x128xf32>
      %128 = arith.mulf %126, %127 : vector<2x1x128xf32>
      %129 = arith.minimumf %103, %119 : vector<2x1x128xf32>
      %130 = arith.maximumf %97, %113 : vector<2x1x128xf32>
      %131 = arith.subf %129, %130 : vector<2x1x128xf32>
      %cst_45 = arith.constant 0.000000e+00 : f32
      %132 = vector.broadcast %cst_45 : f32 to vector<2x1x128xf32>
      %133 = arith.maximumf %131, %132 : vector<2x1x128xf32>
      %134 = arith.minimumf %106, %122 : vector<2x1x128xf32>
      %135 = arith.maximumf %100, %116 : vector<2x1x128xf32>
      %136 = arith.subf %134, %135 : vector<2x1x128xf32>
      %cst_46 = arith.constant 0.000000e+00 : f32
      %137 = vector.broadcast %cst_46 : f32 to vector<2x1x128xf32>
      %138 = arith.maximumf %136, %137 : vector<2x1x128xf32>
      %139 = arith.mulf %133, %138 : vector<2x1x128xf32>
      %140 = arith.addf %125, %128 : vector<2x1x128xf32>
      %141 = arith.subf %140, %139 : vector<2x1x128xf32>
      %cst_47 = arith.constant 1.000000e-07 : f32
      %142 = vector.broadcast %cst_47 : f32 to vector<2x1x128xf32>
      %143 = arith.maximumf %141, %142 : vector<2x1x128xf32>
      %144 = arith.divf %139, %143 : vector<2x1x128xf32>
      %145 = arith.maximumf %103, %119 : vector<2x1x128xf32>
      %146 = arith.minimumf %97, %113 : vector<2x1x128xf32>
      %147 = arith.subf %145, %146 : vector<2x1x128xf32>
      %cst_48 = arith.constant 0.000000e+00 : f32
      %148 = vector.broadcast %cst_48 : f32 to vector<2x1x128xf32>
      %149 = arith.maximumf %147, %148 : vector<2x1x128xf32>
      %150 = arith.maximumf %106, %122 : vector<2x1x128xf32>
      %151 = arith.minimumf %100, %116 : vector<2x1x128xf32>
      %152 = arith.subf %150, %151 : vector<2x1x128xf32>
      %cst_49 = arith.constant 0.000000e+00 : f32
      %153 = vector.broadcast %cst_49 : f32 to vector<2x1x128xf32>
      %154 = arith.maximumf %152, %153 : vector<2x1x128xf32>
      %155 = arith.mulf %149, %154 : vector<2x1x128xf32>
      %156 = arith.subf %155, %141 : vector<2x1x128xf32>
      %cst_50 = arith.constant 1.000000e-07 : f32
      %157 = vector.broadcast %cst_50 : f32 to vector<2x1x128xf32>
      %158 = arith.maximumf %155, %157 : vector<2x1x128xf32>
      %159 = arith.divf %156, %158 : vector<2x1x128xf32>
      %160 = arith.subf %144, %159 : vector<2x1x128xf32>
      %cst_51 = arith.constant 1.000000e+00 : f32
      %161 = vector.broadcast %cst_51 : f32 to vector<2x1x128xf32>
      %162 = arith.subf %161, %160 : vector<2x1x128xf32>
      %163 = arith.mulf %162, %82 : vector<2x1x128xf32>
      %cst_52 = arith.constant dense<0.000000e+00> : vector<2x1xf32>
      %164 = vector.multi_reduction <add>, %163, %cst_52 [2] : vector<2x1x128xf32> to vector<2x1xf32>
      %165 = vector.shape_cast %164 : vector<2x1xf32> to vector<2x1x1xf32>
      %cst_53 = arith.constant dense<0.000000e+00> : vector<2x1xf32>
      %166 = vector.multi_reduction <add>, %165, %cst_53 [1] : vector<2x1x1xf32> to vector<2x1xf32>
      %167 = vector.shape_cast %166 : vector<2x1xf32> to vector<2x1x1xf32>
      %168 = tpu.iota {dimensions = array<i32: 2>} : vector<2x1x128xi32>
      %c3_i32 = arith.constant 3 : i32
      %169 = vector.broadcast %c3_i32 : i32 to vector<2x1x128xi32>
      %170 = arith.cmpi eq, %168, %169 : vector<2x1x128xi32>
      %cst_54 = arith.constant 0.000000e+00 : f32
      %171 = vector.shape_cast %90 : vector<2x1x1xf32> to vector<2x1x1xf32>
      %172 = vector.broadcast %171 : vector<2x1x1xf32> to vector<2x1x128xf32>
      %173 = vector.broadcast %cst_54 : f32 to vector<2x1x128xf32>
      %174 = arith.select %170, %172, %173 : vector<2x1x128xi1>, vector<2x1x128xf32>
      %175 = arith.addf %78, %174 : vector<2x1x128xf32>
      %c4_i32 = arith.constant 4 : i32
      %176 = vector.broadcast %c4_i32 : i32 to vector<2x1x128xi32>
      %177 = arith.cmpi eq, %168, %176 : vector<2x1x128xi32>
      %cst_55 = arith.constant 0.000000e+00 : f32
      %178 = vector.shape_cast %167 : vector<2x1x1xf32> to vector<2x1x1xf32>
      %179 = vector.broadcast %178 : vector<2x1x1xf32> to vector<2x1x128xf32>
      %180 = vector.broadcast %cst_55 : f32 to vector<2x1x128xf32>
      %181 = arith.select %177, %179, %180 : vector<2x1x128xi1>, vector<2x1x128xf32>
      %182 = arith.addf %175, %181 : vector<2x1x128xf32>
      %c0_56 = arith.constant 0 : index
      %c0_57 = arith.constant 0 : index
      %c0_58 = arith.constant 0 : index
      %183 = vector.load %arg5[%c0_56, %c0_57, %c0_58] : memref<2x1x128xf32, #tpu.memory_space<vmem>>, vector<2x1x128xf32>
      tpu.vector_store %arg5[%c0_56, %c0_57, %c0_58], %182 {strides = array<i32>} : memref<2x1x128xf32, #tpu.memory_space<vmem>>, vector<2x1x128xf32>,
    } else {
    }
    return
  }
  func.func @transform_0(%arg0: i32, %arg1: i32) -> (i32, i32, i32) {
    %c0_i32 = arith.constant 0 : i32
    %c0_i32_0 = arith.constant 0 : i32
    return %arg0, %arg1, %c0_i32 : i32, i32, i32
  }
  func.func @transform_1(%arg0: i32, %arg1: i32) -> (i32, i32, i32) {
    %c0_i32 = arith.constant 0 : i32
    %c0_i32_0 = arith.constant 0 : i32
    return %arg0, %arg1, %c0_i32 : i32, i32, i32
  }
  func.func @transform_2(%arg0: i32, %arg1: i32) -> (i32, i32, i32) {
    %c0_i32 = arith.constant 0 : i32
    %c0_i32_0 = arith.constant 0 : i32
    %c0_i32_1 = arith.constant 0 : i32
    return %arg0, %c0_i32, %c0_i32_0 : i32, i32, i32
  }
  func.func @transform_3(%arg0: i32, %arg1: i32) -> (i32, i32, i32) {
    %c0_i32 = arith.constant 0 : i32
    %c0_i32_0 = arith.constant 0 : i32
    %c0_i32_1 = arith.constant 0 : i32
    return %arg0, %c0_i32, %c0_i32_0 : i32, i32, i32
  }
}

</mosaic_0001>

<llo_original>
// kernel: set_criterion_loss.1
$region0: #{set_criterion_loss.1}
  #allocation0 [shape = 'u32[]', space=smem, size = 0x4, offset = 0x4, fixed_abs, tag = 'smem constant byte address 0x4 - core index']
  #allocation1 [shape = 'u32[144,128]{1,0:T(1,128)}', space=vmem, size = 0x12000, scoped, tag = 'internal scratch']
  #allocation2 [shape = 'f32[2,8,128]{2,1,0:T(8,128)}', space=vmem, size = 0x2000, scoped, tag = 'scratch operand']
  %s0 = inlined_call_operand.vmem [shape: bf16[2,8,5], index: 0, kind: input, shape index: {}]
  %s1 = inlined_call_operand.vmem [shape: s32[2,8,1], index: 1, kind: input, shape index: {}]
  %s2 = inlined_call_operand.vmem [shape: f32[2,16,128], index: 2, kind: input, shape index: {}]
  %s3 = inlined_call_operand.vmem [shape: f32[2,1,128], index: 3, kind: output, shape index: {}]
  %s4 = sld [smem:[#allocation0]]
  $region30: #{set_criterion_loss.1} parent=0
    _
  %s6 = ssub.s32 1, %s4
  %s7 = scalar_select 0, %s6, %s4
  // Predicated region
  $region2: #{set_criterion_loss.1} parent=0 // pred_check
    _
  $region3: #{set_criterion_loss.1} parent=0 // pred_check_branch
    %9 = sbr.rel (0) target = $region5
  $region4: #{set_criterion_loss.1} parent=0 // pred_region
    _
  $region5: #{set_criterion_loss.1} parent=0 // pred_fallthru
    _
  // Predicated region
  $region6: #{set_criterion_loss.1} parent=0 // pred_check
    _
  $region7: #{set_criterion_loss.1} parent=0 // pred_check_branch
    %11 = sbr.rel (0) target = $region9
  $region8: #{set_criterion_loss.1} parent=0 // pred_region
    _
  $region9: #{set_criterion_loss.1} parent=0 // pred_fallthru
    _
  // Predicated region
  $region10: #{set_criterion_loss.1} parent=0 // pred_check
    _
  $region11: #{set_criterion_loss.1} parent=0 // pred_check_branch
    %13 = sbr.rel (0) target = $region13
  $region12: #{set_criterion_loss.1} parent=0 // pred_region
    _
  $region13: #{set_criterion_loss.1} parent=0 // pred_fallthru
    _
  %p14 = scmp.eq.s32.totalorder 0, 0
  // Predicated region
  $region14: #{set_criterion_loss.1} parent=0 // pred_check
    %p15 = pneg %p14
  $region15: #{set_criterion_loss.1} parent=0 // pred_check_branch
    %17 = sbr.rel (%p15) target = $region17
  $region16: #{set_criterion_loss.1} parent=0 // pred_region
    %18 = vst [vmem:[#allocation2] sm:$0xff] 0.0
    %19 = vst [vmem:[#allocation2 + $0x8] sm:$0xff] 0.0
  $region17: #{set_criterion_loss.1} parent=0 // pred_fallthru
    _
  %v20 = vld [vmem:[%s0] sm:$0xf]
  %v21 = vld [vmem:[%s0 + $0x4] sm:$0xf]
  %v22 = vunpack.c.l.bf16 %v20
  %v23 = vunpack.c.l.bf16 %v21
  %v24 = vld [vmem:[%s1] sm:$0xff]
  %v25 = vld [vmem:[%s1 + $0x8] sm:$0xff]
  %v26 = vcvt.s32.f32 %v24
  %v27 = vcvt.s32.f32 %v25
  %v28 = vlaneseq
  %v29 = vand.u32 %v28, 127
  %v30 = vcvt.s32.f32 %v29
  %vm31 = vcmask 39936
  %v32 = vsel %vm31, %v22, -inf
  %33 = vmax.xlane.f32.xlu0 %v32
  %v34 = vpop.xlane.xlu0 %33
  %v35 = vsel %vm31, %v23, -inf
  %36 = vmax.xlane.f32.xlu0 %v35
  %v37 = vpop.xlane.xlu0 %36
  %v38 = vsub.f32 %v22, %v34
  %v39 = vsub.f32 %v23, %v37
  %v40 = vmul.f32 %v38, 1.442695
  %v41 = vpow.pop %v40
  %v42 = vmul.f32 %v39, 1.442695
  %v43 = vpow.pop %v42
  %v44 = vsel %vm31, %v41, 0.0
  %45 = vadd.xlane.f32.xlu0 %v44
  %v46 = vpop.xlane.xlu0 %45
  %v47 = vsel %vm31, %v43, 0.0
  %48 = vadd.xlane.f32.xlu0 %v47
  %v49 = vpop.xlane.xlu0 %48
  %v50 = vlog2.pop %v46
  %v51 = vmul.f32 %v50, 0.6931472
  %v52 = vlog2.pop %v49
  %v53 = vmul.f32 %v52, 0.6931472
  %v54 = vadd.f32 %v34, %v51
  %v55 = vadd.f32 %v37, %v53
  %57 = vset.pattern.permute.xlu0 0
  %58 = vperm.xlu0 %57, %v26
  %v59 = vpop.permute.xlu0 %58
  %62 = vset.pattern.permute.xlu0 0
  %63 = vperm.xlu0 %62, %v27
  %v64 = vpop.permute.xlu0 %63
  %vm66 = vcmp.eq.f32.partialorder %v30, %v59
  %vm67 = vcmp.eq.f32.partialorder %v30, %v64
  %v68 = vsel %vm66, %v22, 0.0
  %v69 = vsel %vm67, %v23, 0.0
  %v70 = vsel %vm31, %v68, 0.0
  %71 = vadd.xlane.f32.xlu0 %v70
  %v72 = vpop.xlane.xlu0 %71
  %v73 = vsel %vm31, %v69, 0.0
  %74 = vadd.xlane.f32.xlu0 %v73
  %v75 = vpop.xlane.xlu0 %74
  %vm76 = vcmp.eq.f32.partialorder %v26, 4.0
  %vm77 = vcmp.eq.f32.partialorder %v27, 4.0
  %v78 = vsel %vm76, 0.1, 1.0
  %v79 = vsel %vm77, 0.1, 1.0
  %v80 = vsub.f32 %v54, %v72
  %v81 = vsub.f32 %v55, %v75
  %v82 = vmul.f32 %v80, %v78
  %v83 = vmul.f32 %v81, %v79
  %vm84 = vcmp.eq.f32.partialorder %v22, %v34
  %vm85 = vcmp.eq.f32.partialorder %v23, %v37
  %v86 = vsel %vm84, %v30, 5.0
  %v87 = vsel %vm85, %v30, 5.0
  %v88 = vsel %vm31, %v86, inf
  %89 = vmin.xlane.f32.xlu0 %v88
  %v90 = vpop.xlane.xlu0 %89
  %v91 = vsel %vm31, %v87, inf
  %92 = vmin.xlane.f32.xlu0 %v91
  %v93 = vpop.xlane.xlu0 %92
  %vm94 = vcmp.ne.f32.partialorder %v90, 4.0
  %vm95 = vcmp.ne.f32.partialorder %v93, 4.0
  %v96 = vsel %vm94, 1, 0
  %v97 = vsel %vm95, 1, 0
  %v98 = vcvt.s32.f32 %v96
  %v99 = vcvt.s32.f32 %v97
  %vm100 = vcmp.ne.f32.partialorder %v26, 4.0
  %vm101 = vcmp.ne.f32.partialorder %v27, 4.0
  %v102 = vsel %vm100, 1, 0
  %v103 = vsel %vm101, 1, 0
  %v104 = vcvt.s32.f32 %v102
  %v105 = vcvt.s32.f32 %v103
  %vm106 = vcmp.eq.f32.partialorder %v90, %v26
  %vm107 = vcmp.eq.f32.partialorder %v93, %v27
  %v108 = vsel %vm106, 1, 0
  %v109 = vsel %vm107, 1, 0
  %v110 = vcvt.s32.f32 %v108
  %v111 = vcvt.s32.f32 %v109
  %v112 = vmul.f32 %v104, %v110
  %v113 = vmul.f32 %v105, %v111
  %v114 = vld [vmem:[#allocation2] sm:$0xff]
  %v115 = vld [vmem:[#allocation2 + $0x8] sm:$0xff]
  %vm116 = vcmp.eq.s32.totalorder %v29, 0
  %118 = vset.pattern.permute.xlu0 0
  %119 = vperm.xlu0 %118, %v82
  %v120 = vpop.permute.xlu0 %119
  %123 = vset.pattern.permute.xlu0 0
  %124 = vperm.xlu0 %123, %v83
  %v125 = vpop.permute.xlu0 %124
  %v127 = vsel %vm116, %v120, 0.0
  %v128 = vsel %vm116, %v125, 0.0
  %vm129 = vcmp.eq.s32.totalorder %v29, 1
  %131 = vset.pattern.permute.xlu0 0
  %132 = vperm.xlu0 %131, %v112
  %v133 = vpop.permute.xlu0 %132
  %136 = vset.pattern.permute.xlu0 0
  %137 = vperm.xlu0 %136, %v113
  %v138 = vpop.permute.xlu0 %137
  %v140 = vsel %vm129, %v133, 0.0
  %v141 = vsel %vm129, %v138, 0.0
  %v142 = vadd.f32 %v127, %v140
  %v143 = vadd.f32 %v128, %v141
  %vm144 = vcmp.eq.s32.totalorder %v29, 2
  %v145 = vsel %vm144, %v98, 0.0
  %v146 = vsel %vm144, %v99, 0.0
  %v147 = vadd.f32 %v142, %v145
  %v148 = vadd.f32 %v143, %v146
  %v149 = vadd.f32 %v114, %v147
  %v150 = vadd.f32 %v115, %v148
  %151 = vst [vmem:[#allocation2] sm:$0xff] %v149
  %152 = vst [vmem:[#allocation2 + $0x8] sm:$0xff] %v150
  // Predicated region
  $region18: #{set_criterion_loss.1} parent=0 // pred_check
    %p153 = pneg %p14
  $region19: #{set_criterion_loss.1} parent=0 // pred_check_branch
    %155 = sbr.rel (%p153) target = $region21
  $region20: #{set_criterion_loss.1} parent=0 // pred_region
    %v156 = vld [vmem:[#allocation2] sm:$0xff]
    %v157 = vld [vmem:[#allocation2 + $0x8] sm:$0xff]
    %v158 = vrot.slane %v156, 4
    %v159 = vadd.f32 %v156, %v158
    %v160 = vrot.slane %v159, 2
    %v161 = vadd.f32 %v159, %v160
    %v162 = vrot.slane %v161, 1
    %v163 = vadd.f32 %v161, %v162
    %v164 = vrot.slane %v157, 4
    %v165 = vadd.f32 %v157, %v164
    %v166 = vrot.slane %v165, 2
    %v167 = vadd.f32 %v165, %v166
    %v168 = vrot.slane %v167, 1
    %v169 = vadd.f32 %v167, %v168
    %v170 = vld [vmem:[%s2] sm:$0xff]
    %v171 = vld [vmem:[%s2 + $0x8] sm:$0xff]
    %v172 = vld [vmem:[%s2 + $0x10] sm:$0xff]
    %v173 = vld [vmem:[%s2 + $0x18] sm:$0xff]
    %v176 = vrot.slane %v170, 4
    %v177 = vrot.slane %v172, 4
    %v180 = vsub.f32 %v170, %v176
    %v181 = vsub.f32 %v172, %v177
    %v182 = vand.u32 2147483647, %v180
    %v183 = vand.u32 2147483647, %v181
    %v184 = vlaneseq
    %v185 = vshrl.u32 %v184, 7
    %v186 = vsub.s32 0, %v185
    %v187 = vrot.slane %v171, %v186
    %v188 = vlaneseq
    %v189 = vshrl.u32 %v188, 7
    %v190 = vsub.s32 0, %v189
    %v191 = vrot.slane %v173, %v190
    %v192 = vmul.f32 %v182, %v187
    %v193 = vmul.f32 %v183, %v191
    %vm194 = vcmask 1043456
    %v195 = vsel %vm194, %v192, 0.0
    %196 = vadd.xlane.f32.xlu0 %v195
    %v197 = vpop.xlane.xlu0 %196
    %v198 = vsel %vm194, %v193, 0.0
    %199 = vadd.xlane.f32.xlu0 %v198
    %v200 = vpop.xlane.xlu0 %199
    %v201 = vsel %vm194, %v197, 0.0
    %v202 = vrot.slane %v201, 4
    %v203 = vadd.f32 %v201, %v202
    %v204 = vrot.slane %v203, 2
    %v205 = vadd.f32 %v203, %v204
    %v206 = vrot.slane %v205, 1
    %v207 = vadd.f32 %v205, %v206
    %v208 = vsel %vm194, %v200, 0.0
    %v209 = vrot.slane %v208, 4
    %v210 = vadd.f32 %v208, %v209
    %v211 = vrot.slane %v210, 2
    %v212 = vadd.f32 %v210, %v211
    %v213 = vrot.slane %v212, 1
    %v214 = vadd.f32 %v212, %v213
    %v215 = vmul.f32 %v170, 0.5
    %v216 = vmul.f32 %v172, 0.5
    %v219 = vrot.slane %v215, 2
    %v220 = vrot.slane %v216, 2
    %v223 = vsub.f32 %v170, %v219
    %v224 = vsub.f32 %v172, %v220
    %v225 = vadd.f32 %v170, %v219
    %v226 = vadd.f32 %v172, %v220
    %v227 = vsub.f32 %v225, %v223
    %v228 = vsub.f32 %v226, %v224
    %v231 = vrot.slane %v227, 1
    %v232 = vrot.slane %v228, 1
    %v235 = vmul.f32 %v227, %v231
    %v236 = vmul.f32 %v228, %v232
    %v239 = vrot.slane %v225, 4
    %v240 = vrot.slane %v226, 4
    %v243 = vmin.f32 %v225, %v239
    %v244 = vmin.f32 %v226, %v240
    %v247 = vrot.slane %v223, 4
    %v248 = vrot.slane %v224, 4
    %v251 = vmax.f32 %v223, %v247
    %v252 = vmax.f32 %v224, %v248
    %v253 = vsub.f32 %v243, %v251
    %v254 = vsub.f32 %v244, %v252
    %v255 = vmax.f32 %v253, 0.0
    %v256 = vmax.f32 %v254, 0.0
    %v259 = vrot.slane %v255, 1
    %v260 = vrot.slane %v256, 1
    %v263 = vmul.f32 %v255, %v259
    %v264 = vmul.f32 %v256, %v260
    %v267 = vrot.slane %v235, 4
    %v268 = vrot.slane %v236, 4
    %v271 = vadd.f32 %v235, %v267
    %v272 = vadd.f32 %v236, %v268
    %v273 = vsub.f32 %v271, %v263
    %v274 = vsub.f32 %v272, %v264
    %v275 = vmax.f32 %v273, 1e-07
    %v276 = vmax.f32 %v274, 1e-07
    %v277 = vrcp.pop %v275
    %v278 = vmul.f32 %v263, %v277
    %v279 = vrcp.pop %v276
    %v280 = vmul.f32 %v264, %v279
    %v281 = vmax.f32 %v225, %v239
    %v282 = vmax.f32 %v226, %v240
    %v283 = vmin.f32 %v223, %v247
    %v284 = vmin.f32 %v224, %v248
    %v285 = vsub.f32 %v281, %v283
    %v286 = vsub.f32 %v282, %v284
    %v287 = vmax.f32 %v285, 0.0
    %v288 = vmax.f32 %v286, 0.0
    %v291 = vrot.slane %v287, 1
    %v292 = vrot.slane %v288, 1
    %v295 = vmul.f32 %v287, %v291
    %v296 = vmul.f32 %v288, %v292
    %v297 = vsub.f32 %v295, %v273
    %v298 = vsub.f32 %v296, %v274
    %v299 = vmax.f32 %v295, 1e-07
    %v300 = vmax.f32 %v296, 1e-07
    %v301 = vrcp.pop %v299
    %v302 = vmul.f32 %v297, %v301
    %v303 = vrcp.pop %v300
    %v304 = vmul.f32 %v298, %v303
    %v305 = vsub.f32 %v278, %v302
    %v306 = vsub.f32 %v280, %v304
    %v307 = vsub.f32 1.0, %v305
    %v308 = vsub.f32 1.0, %v306
    %v309 = vmul.f32 %v307, %v171
    %v310 = vmul.f32 %v308, %v173
    %vm311 = vcmask 1040384
    %v312 = vsel %vm311, %v309, 0.0
    %313 = vadd.xlane.f32.xlu0 %v312
    %v314 = vpop.xlane.xlu0 %313
    %v315 = vsel %vm311, %v310, 0.0
    %316 = vadd.xlane.f32.xlu0 %v315
    %v317 = vpop.xlane.xlu0 %316
    %v318 = vadd.f32 %v314, 0.0
    %v319 = vadd.f32 %v317, 0.0
    %vm320 = vcmp.eq.s32.totalorder %v29, 3
    %v321 = vsel %vm320, %v207, 0.0
    %v322 = vsel %vm320, %v214, 0.0
    %v323 = vadd.f32 %v163, %v321
    %v324 = vadd.f32 %v169, %v322
    %vm325 = vcmp.eq.s32.totalorder %v29, 4
    %v326 = vsel %vm325, %v318, 0.0
    %v327 = vsel %vm325, %v319, 0.0
    %v328 = vadd.f32 %v323, %v326
    %v329 = vadd.f32 %v324, %v327
    %330 = vst [vmem:[%s3] sm:$0x1] %v328
    %331 = vst [vmem:[%s3 + $0x1] sm:$0x1] %v329
  $region21: #{set_criterion_loss.1} parent=0 // pred_fallthru
    _
  // Predicated region
  $region22: #{set_criterion_loss.1} parent=0 // pred_check
    _
  $region23: #{set_criterion_loss.1} parent=0 // pred_check_branch
    %333 = sbr.rel (0) target = $region25
  $region24: #{set_criterion_loss.1} parent=0 // pred_region
    _
  $region25: #{set_criterion_loss.1} parent=0 // pred_fallthru
    _
  // Predicated region
  $region26: #{set_criterion_loss.1} parent=0 // pred_check
    _
  $region27: #{set_criterion_loss.1} parent=0 // pred_check_branch
    %335 = sbr.rel (0) target = $region29
  $region28: #{set_criterion_loss.1} parent=0 // pred_region
    _
  $region29: #{set_criterion_loss.1} parent=0 // pred_fallthru
    _

</llo_original>
